<compile_context>
chip_gen: v5e
topology: v5e:2x2
jax: 0.10.0
libtpu: 0.0.40
codegen_flags: <defaults>
</compile_context>

<pallas_src>
import jax
import jax.numpy as jnp
from jax import lax
from jax.experimental import pallas as pl
from jax.experimental.pallas import tpu as pltpu


def mlp_kernel(x_ref, w1_ref, b1_ref, w2_ref, b2_ref, w3t_ref, b3_ref, o_ref):
    x = x_ref[...]                                             # (TB, 9) batch-on-sublane
    # fc1 + ReLU on the MXU. Contract the feature axis of BOTH operands so the result
    # lands batch-on-lane (16, TB) without any wrapper-side transpose of x.
    h1 = lax.dot_general(w1_ref[...], x, (((1,), (1,)), ((), ())),
                         preferred_element_type=jnp.float32) + b1_ref[...]
    h1 = jnp.maximum(h1, 0.0)                                  # (16, TB)
    # fc2 + ReLU on the MXU.
    h2 = jnp.dot(w2_ref[...], h1, preferred_element_type=jnp.float32) + b2_ref[...]
    h2 = jnp.maximum(h2, 0.0)                                  # (8, TB)
    # fc3 + sigmoid off the MXU: only 8 MACs/elem, so VPU broadcast-multiply + XLU
    # sublane reduce instead of another full-TB vmatmul stream. w3t is (8, 1).
    logit = jnp.sum(w3t_ref[...] * h2, axis=0, keepdims=True) + b3_ref[...]   # (1, TB)
    o_ref[...] = jax.nn.sigmoid(logit)                         # lane-dense (1, TB) store


def _round_up(n, m):
    return ((n + m - 1) // m) * m


def net_forward(x, params, *, tile_b=8192):
    """x: (B, 9) float32. params: torch-layout weights w* (out, in), biases b* (out, 1)."""
    B = x.shape[0]
    w1, b1 = params["w1"], params["b1"]
    w2, b2 = params["w2"], params["b2"]
    w3, b3 = params["w3"], params["b3"]
    w3t = w3.T                                                 # (8, 1) for the VPU fc3

    # Tiny batches only: round up to one full 128-lane tile (a few KiB). For B >= 128 the
    # input is passed through untouched and Pallas masks the ragged last tile itself —
    # no extra HBM pass over x.
    B_in = max(B, 128)
    x_in = x if B_in == B else jnp.pad(x, ((0, B_in - B), (0, 0)))

    # Batch tile: multiple of 128 lanes, capped at tile_b, and sized so the grid has
    # >= 2 tiles whenever the batch allows it (both v7x TensorCores used). A (TB, 9)
    # f32 x-tile double-buffered plus the (16,TB)/(8,TB) f32 intermediates stay far
    # below the 32 MiB scoped VMEM limit on all of v5e/v6e/v7x.
    TB = min(tile_b, max(128, _round_up(pl.cdiv(B_in, 2), 128)))
    grid = (pl.cdiv(B_in, TB),)

    const = lambda a: pl.BlockSpec(a.shape, lambda i: (0,) * a.ndim)

    out_t = pl.pallas_call(
        mlp_kernel,
        out_shape=jax.ShapeDtypeStruct((1, B_in), jnp.float32),
        grid=grid,
        in_specs=[
            pl.BlockSpec((TB, 9), lambda i: (i, 0)),   # x streams tile-by-tile over batch
            const(w1), const(b1),                      # weights/biases resident across steps
            const(w2), const(b2),
            const(w3t), const(b3),
        ],
        out_specs=pl.BlockSpec((1, TB), lambda i: (0, i)),
        compiler_params=pltpu.CompilerParams(
            dimension_semantics=("parallel",),         # shard batch tiles across TCs on v7x
            vmem_limit_bytes=32 * 1024 * 1024,
        ),
    )(x_in, w1, b1, w2, b2, w3t, b3)                   # (1, B_in)

    return out_t[0, :B][:, None]                       # (B, 1) — same layout as torch


def init_params(key):
    """Deterministic init mirroring nn.Linear: fc1(9->16), fc2(16->8), fc3(8->1), torch layout."""
    ks = jax.random.split(key, 6)

    def linear(kw, kb, fan_in, fan_out):
        bound = 1.0 / jnp.sqrt(float(fan_in))
        w = jax.random.uniform(kw, (fan_out, fan_in), jnp.float32, -bound, bound)
        b = jax.random.uniform(kb, (fan_out, 1), jnp.float32, -bound, bound)
        return w, b

    w1, b1 = linear(ks[0], ks[1], 9, 16)
    w2, b2 = linear(ks[2], ks[3], 16, 8)
    w3, b3 = linear(ks[4], ks[5], 8, 1)
    return {"w1": w1, "b1": b1, "w2": w2, "b2": b2, "w3": w3, "b3": b3}


def net_reference(x, p):
    # fc1/fc2 via matmul (same default MXU precision path as the kernel); fc3 as an
    # elementwise multiply + sum, matching the kernel's f32 VPU formulation.
    h1 = jnp.maximum(x @ p["w1"].T + p["b1"][:, 0], 0.0)
    h2 = jnp.maximum(h1 @ p["w2"].T + p["b2"][:, 0], 0.0)
    logit = jnp.sum(h2 * p["w3"][0][None, :], axis=-1, keepdims=True) + p["b3"][0, 0]
    return jax.nn.sigmoid(logit)


if __name__ == "__main__":
    key = jax.random.PRNGKey(0)
    k_x, k_p = jax.random.split(key)
    batch = 8
    x = jax.random.normal(k_x, (batch, 9), jnp.float32)
    params = init_params(k_p)

    out = net_forward(x, params)
    jax.block_until_ready(out)

    ref = net_reference(x, params)
    assert out.shape == (batch, 1)
    # 1e-4: allows for MXU accumulation-order / precision-path differences between the
    # Pallas kernel and the XLA reference while still catching any real layout bug.
    assert jnp.allclose(out, ref, atol=1e-4, rtol=1e-4)
    print("KERNEL_OK")
</pallas_src>

<mosaic_0001>
module attributes {stable_mosaic.version = 11 : i64} {
  func.func @mlp_kernel(%arg0: i32, %arg1: memref<128x9xf32, #tpu.memory_space<vmem>>, %arg2: memref<16x9xf32, #tpu.memory_space<vmem>>, %arg3: memref<16x1xf32, #tpu.memory_space<vmem>>, %arg4: memref<8x16xf32, #tpu.memory_space<vmem>>, %arg5: memref<8x1xf32, #tpu.memory_space<vmem>>, %arg6: memref<8x1xf32, #tpu.memory_space<vmem>>, %arg7: memref<1x1xf32, #tpu.memory_space<vmem>>, %arg8: memref<1x128xf32, #tpu.memory_space<vmem>>) attributes {dimension_semantics = [#tpu.dimension_semantics<parallel>], iteration_bounds = array<i64: 1>, scalar_prefetch = 0 : i64, scratch_operands = 0 : i64, tpu.core_type = #tpu.core_type<tc>, window_params = [{transform_indices = @transform_0, window_bounds = array<i64: 128, 9>}, {pipeline_mode = #tpu.pipeline_mode<synchronous>, transform_indices = @transform_1, window_bounds = array<i64: 16, 9>}, {pipeline_mode = #tpu.pipeline_mode<synchronous>, transform_indices = @transform_2, window_bounds = array<i64: 16, 1>}, {pipeline_mode = #tpu.pipeline_mode<synchronous>, transform_indices = @transform_3, window_bounds = array<i64: 8, 16>}, {pipeline_mode = #tpu.pipeline_mode<synchronous>, transform_indices = @transform_4, window_bounds = array<i64: 8, 1>}, {pipeline_mode = #tpu.pipeline_mode<synchronous>, transform_indices = @transform_5, window_bounds = array<i64: 8, 1>}, {pipeline_mode = #tpu.pipeline_mode<synchronous>, transform_indices = @transform_6, window_bounds = array<i64: 1, 1>}, {transform_indices = @transform_7, window_bounds = array<i64: 1, 128>}]} {
    %c0 = arith.constant 0 : index
    %c0_0 = arith.constant 0 : index
    %0 = vector.load %arg1[%c0, %c0_0] : memref<128x9xf32, #tpu.memory_space<vmem>>, vector<128x9xf32>
    %c0_1 = arith.constant 0 : index
    %c0_2 = arith.constant 0 : index
    %1 = vector.load %arg2[%c0_1, %c0_2] : memref<16x9xf32, #tpu.memory_space<vmem>>, vector<16x9xf32>
    %cst = arith.constant dense<0.000000e+00> : vector<16x128xf32>
    %2 = tpu.matmul %1, %0, %cst {dimension_numbers = #tpu.dot_dimension_numbers<[1], [1], [0], [0], [0, 0, 1, 0], [], []>} : vector<16x9xf32>, vector<128x9xf32>, vector<16x128xf32> -> vector<16x128xf32>
    %c0_3 = arith.constant 0 : index
    %c0_4 = arith.constant 0 : index
    %3 = vector.load %arg3[%c0_3, %c0_4] : memref<16x1xf32, #tpu.memory_space<vmem>>, vector<16x1xf32>
    %4 = vector.broadcast %3 : vector<16x1xf32> to vector<16x128xf32>
    %5 = arith.addf %2, %4 : vector<16x128xf32>
    %cst_5 = arith.constant 0.000000e+00 : f32
    %6 = vector.broadcast %cst_5 : f32 to vector<16x128xf32>
    %7 = arith.maximumf %5, %6 : vector<16x128xf32>
    %c0_6 = arith.constant 0 : index
    %c0_7 = arith.constant 0 : index
    %8 = vector.load %arg4[%c0_6, %c0_7] : memref<8x16xf32, #tpu.memory_space<vmem>>, vector<8x16xf32>
    %cst_8 = arith.constant dense<0.000000e+00> : vector<8x128xf32>
    %9 = tpu.matmul %8, %7, %cst_8 {dimension_numbers = #tpu.dot_dimension_numbers<[1], [0], [0], [1], [0, 0, 1, 1], [], []>} : vector<8x16xf32>, vector<16x128xf32>, vector<8x128xf32> -> vector<8x128xf32>
    %c0_9 = arith.constant 0 : index
    %c0_10 = arith.constant 0 : index
    %10 = vector.load %arg5[%c0_9, %c0_10] : memref<8x1xf32, #tpu.memory_space<vmem>>, vector<8x1xf32>
    %11 = vector.broadcast %10 : vector<8x1xf32> to vector<8x128xf32>
    %12 = arith.addf %9, %11 : vector<8x128xf32>
    %cst_11 = arith.constant 0.000000e+00 : f32
    %13 = vector.broadcast %cst_11 : f32 to vector<8x128xf32>
    %14 = arith.maximumf %12, %13 : vector<8x128xf32>
    %c0_12 = arith.constant 0 : index
    %c0_13 = arith.constant 0 : index
    %15 = vector.load %arg6[%c0_12, %c0_13] : memref<8x1xf32, #tpu.memory_space<vmem>>, vector<8x1xf32>
    %16 = vector.broadcast %15 : vector<8x1xf32> to vector<8x128xf32>
    %17 = arith.mulf %16, %14 : vector<8x128xf32>
    %cst_14 = arith.constant dense<0.000000e+00> : vector<128xf32>
    %18 = vector.multi_reduction <add>, %17, %cst_14 [0] : vector<8x128xf32> to vector<128xf32>
    %19 = vector.shape_cast %18 : vector<128xf32> to vector<1x128xf32>
    %c0_15 = arith.constant 0 : index
    %c0_16 = arith.constant 0 : index
    %20 = vector.load %arg7[%c0_15, %c0_16] : memref<1x1xf32, #tpu.memory_space<vmem>>, vector<1x1xf32>
    %21 = vector.broadcast %20 : vector<1x1xf32> to vector<1x128xf32>
    %22 = arith.addf %19, %21 : vector<1x128xf32>
    %23 = arith.negf %22 : vector<1x128xf32>
    %24 = math.exp %23 : vector<1x128xf32>
    %cst_17 = arith.constant 1.000000e+00 : f32
    %25 = vector.broadcast %cst_17 : f32 to vector<1x128xf32>
    %26 = arith.addf %25, %24 : vector<1x128xf32>
    %27 = arith.divf %25, %26 : vector<1x128xf32>
    %c0_18 = arith.constant 0 : index
    %c0_19 = arith.constant 0 : index
    %28 = vector.load %arg8[%c0_18, %c0_19] : memref<1x128xf32, #tpu.memory_space<vmem>>, vector<1x128xf32>
    tpu.vector_store %arg8[%c0_18, %c0_19], %27 {strides = array<i32>} : memref<1x128xf32, #tpu.memory_space<vmem>>, vector<1x128xf32>,
    return
  }
  func.func @transform_0(%arg0: i32) -> (i32, i32) {
    %c0_i32 = arith.constant 0 : i32
    %c0_i32_0 = arith.constant 0 : i32
    return %arg0, %c0_i32 : i32, i32
  }
  func.func @transform_1(%arg0: i32) -> (i32, i32) {
    %c0_i32 = arith.constant 0 : i32
    %c0_i32_0 = arith.constant 0 : i32
    %c0_i32_1 = arith.constant 0 : i32
    return %c0_i32, %c0_i32_0 : i32, i32
  }
  func.func @transform_2(%arg0: i32) -> (i32, i32) {
    %c0_i32 = arith.constant 0 : i32
    %c0_i32_0 = arith.constant 0 : i32
    %c0_i32_1 = arith.constant 0 : i32
    return %c0_i32, %c0_i32_0 : i32, i32
  }
  func.func @transform_3(%arg0: i32) -> (i32, i32) {
    %c0_i32 = arith.constant 0 : i32
    %c0_i32_0 = arith.constant 0 : i32
    %c0_i32_1 = arith.constant 0 : i32
    return %c0_i32, %c0_i32_0 : i32, i32
  }
  func.func @transform_4(%arg0: i32) -> (i32, i32) {
    %c0_i32 = arith.constant 0 : i32
    %c0_i32_0 = arith.constant 0 : i32
    %c0_i32_1 = arith.constant 0 : i32
    return %c0_i32, %c0_i32_0 : i32, i32
  }
  func.func @transform_5(%arg0: i32) -> (i32, i32) {
    %c0_i32 = arith.constant 0 : i32
    %c0_i32_0 = arith.constant 0 : i32
    %c0_i32_1 = arith.constant 0 : i32
    return %c0_i32, %c0_i32_0 : i32, i32
  }
  func.func @transform_6(%arg0: i32) -> (i32, i32) {
    %c0_i32 = arith.constant 0 : i32
    %c0_i32_0 = arith.constant 0 : i32
    %c0_i32_1 = arith.constant 0 : i32
    return %c0_i32, %c0_i32_0 : i32, i32
  }
  func.func @transform_7(%arg0: i32) -> (i32, i32) {
    %c0_i32 = arith.constant 0 : i32
    %c0_i32_0 = arith.constant 0 : i32
    return %c0_i32, %arg0 : i32, i32
  }
}

</mosaic_0001>

<llo_original>
// kernel: tpu_custom_call.1
$region0: #{tpu_custom_call.1}
  #allocation0 [shape = 'u32[]', space=smem, size = 0x4, offset = 0x4, fixed_abs, tag = 'smem constant byte address 0x4 - core index']
  #allocation1 [shape = 'u32[72,128]{1,0:T(1,128)}', space=vmem, size = 0x9000, scoped, tag = 'internal scratch']
  #allocation2 [shape = 'f32[1,1]{1,0:T(1,128)S(1)}', space=vmem, size = 0x200, scoped, tag = 'scoped memory for tpu_custom_call.1']
  %s0 = inlined_call_operand.vmem [shape: f32[128,9], index: 0, kind: input, shape index: {}]
  %s1 = inlined_call_operand.vmem [shape: f32[16,9], index: 1, kind: input, shape index: {}]
  %s2 = inlined_call_operand.vmem [shape: f32[16,1], index: 2, kind: input, shape index: {}]
  %s3 = inlined_call_operand.vmem [shape: f32[8,16], index: 3, kind: input, shape index: {}]
  %s4 = inlined_call_operand.vmem [shape: f32[8,1], index: 4, kind: input, shape index: {}]
  %s5 = inlined_call_operand.vmem [shape: f32[8,1], index: 5, kind: input, shape index: {}]
  %s6 = inlined_call_operand.<no memory space> [shape: f32[1,1], index: 6, kind: input, shape index: {}]
  %s7 = inlined_call_operand.hbm [shape: f32[1,128], index: 7, kind: output, shape index: {}]
  %s8 = sld [smem:[#allocation0]]
  $region38: #{tpu_custom_call.1} parent=0
    _
  %s10 = ssub.s32 1, %s8
  %s11 = scalar_select 0, %s10, %s8
  %v12 = vstv %s6
  %13 = vst [vmem:[#allocation2] sm:$0x1] %v12
  $region1: #{tpu_custom_call.1} parent=0
    #allocation3 [shape = 'u8[512]{0}', space=vmem, size = 0x400, scoped, tag = 'output window, operand 0, single buffered']
    #allocation4 [shape = 's32[1]{0}', space=sflag, size = 0x4, scoped, tag = 'scoped memory for tpu_custom_call.1']
    %14 = vsyncpa [#allocation4], 0
    // Predicated region
    $region2: #{tpu_custom_call.1} parent=1 // pred_check
      _
    $region3: #{tpu_custom_call.1} parent=1 // pred_check_branch
      %16 = sbr.rel (0) target = $region5
    $region4: #{tpu_custom_call.1} parent=1 // pred_region
      _
    $region5: #{tpu_custom_call.1} parent=1 // pred_fallthru
      _
    // Predicated region
    $region6: #{tpu_custom_call.1} parent=1 // pred_check
      _
    $region7: #{tpu_custom_call.1} parent=1 // pred_check_branch
      %18 = sbr.rel (0) target = $region9
    $region8: #{tpu_custom_call.1} parent=1 // pred_region
      _
    $region9: #{tpu_custom_call.1} parent=1 // pred_fallthru
      _
    // Predicated region
    $region10: #{tpu_custom_call.1} parent=1 // pred_check
      _
    $region11: #{tpu_custom_call.1} parent=1 // pred_check_branch
      %20 = sbr.rel (0) target = $region13
    $region12: #{tpu_custom_call.1} parent=1 // pred_region
      _
    $region13: #{tpu_custom_call.1} parent=1 // pred_fallthru
      _
    // Predicated region
    $region14: #{tpu_custom_call.1} parent=1 // pred_check
      _
    $region15: #{tpu_custom_call.1} parent=1 // pred_check_branch
      %22 = sbr.rel (0) target = $region17
    $region16: #{tpu_custom_call.1} parent=1 // pred_region
      _
    $region17: #{tpu_custom_call.1} parent=1 // pred_fallthru
      _
    // Predicated region
    $region18: #{tpu_custom_call.1} parent=1 // pred_check
      _
    $region19: #{tpu_custom_call.1} parent=1 // pred_check_branch
      %24 = sbr.rel (0) target = $region21
    $region20: #{tpu_custom_call.1} parent=1 // pred_region
      _
    $region21: #{tpu_custom_call.1} parent=1 // pred_fallthru
      _
    // Predicated region
    $region22: #{tpu_custom_call.1} parent=1 // pred_check
      _
    $region23: #{tpu_custom_call.1} parent=1 // pred_check_branch
      %26 = sbr.rel (0) target = $region25
    $region24: #{tpu_custom_call.1} parent=1 // pred_region
      _
    $region25: #{tpu_custom_call.1} parent=1 // pred_fallthru
      _
    // Predicated region
    $region26: #{tpu_custom_call.1} parent=1 // pred_check
      _
    $region27: #{tpu_custom_call.1} parent=1 // pred_check_branch
      %28 = sbr.rel (0) target = $region29
    $region28: #{tpu_custom_call.1} parent=1 // pred_region
      _
    $region29: #{tpu_custom_call.1} parent=1 // pred_fallthru
      _
    %v29 = vld [vmem:[%s0] sm:$0xff]
    %v30 = vld [vmem:[%s0 + $0x8] sm:$0xff]
    %v31 = vld [vmem:[%s0 + $0x10] sm:$0xff]
    %v32 = vld [vmem:[%s0 + $0x18] sm:$0xff]
    %v33 = vld [vmem:[%s0 + $0x20] sm:$0xff]
    %v34 = vld [vmem:[%s0 + $0x28] sm:$0xff]
    %v35 = vld [vmem:[%s0 + $0x30] sm:$0xff]
    %v36 = vld [vmem:[%s0 + $0x38] sm:$0xff]
    %v37 = vld [vmem:[%s0 + $0x40] sm:$0xff]
    %v38 = vld [vmem:[%s0 + $0x48] sm:$0xff]
    %v39 = vld [vmem:[%s0 + $0x50] sm:$0xff]
    %v40 = vld [vmem:[%s0 + $0x58] sm:$0xff]
    %v41 = vld [vmem:[%s0 + $0x60] sm:$0xff]
    %v42 = vld [vmem:[%s0 + $0x68] sm:$0xff]
    %v43 = vld [vmem:[%s0 + $0x70] sm:$0xff]
    %v44 = vld [vmem:[%s0 + $0x78] sm:$0xff]
    %v45 = vld [vmem:[%s1] sm:$0xff]
    %v46 = vld [vmem:[%s1 + $0x8] sm:$0xff]
    %v47 = vld [vmem:[%s2] sm:$0xff]
    %v48 = vld [vmem:[%s2 + $0x8] sm:$0xff]
    %50 = vset.pattern.permute.xlu0 0
    %51 = vperm.xlu0 %50, %v47
    %v52 = vpop.permute.xlu0 %51
    %55 = vset.pattern.permute.xlu0 0
    %56 = vperm.xlu0 %55, %v48
    %v57 = vpop.permute.xlu0 %56
    %vm59 = vcmask 72704
    %v61 = vsel %vm59, %v45, 0
    %v64 = vsel %vm59, %v46, 0
    %v67 = vsel %vm59, %v29, 0
    %v70 = vsel %vm59, %v30, 0
    %v73 = vsel %vm59, %v31, 0
    %v76 = vsel %vm59, %v32, 0
    %v79 = vsel %vm59, %v33, 0
    %v82 = vsel %vm59, %v34, 0
    %v85 = vsel %vm59, %v35, 0
    %v88 = vsel %vm59, %v36, 0
    %v91 = vsel %vm59, %v37, 0
    %v94 = vsel %vm59, %v38, 0
    %v97 = vsel %vm59, %v39, 0
    %v100 = vsel %vm59, %v40, 0
    %v103 = vsel %vm59, %v41, 0
    %v106 = vsel %vm59, %v42, 0
    %v109 = vsel %vm59, %v43, 0
    %v112 = vsel %vm59, %v44, 0
    %114 = vmatpush.xpose.msra.mxu0 %v112
    %115 = vmatpush.xpose.msra.mxu0 %v109
    %116 = vmatpush.xpose.msra.mxu0 %v106
    %117 = vmatpush.xpose.msra.mxu0 %v103
    %118 = vmatpush.xpose.msra.mxu0 %v100
    %119 = vmatpush.xpose.msra.mxu0 %v97
    %120 = vmatpush.xpose.msra.mxu0 %v94
    %121 = vmatpush.xpose.msra.mxu0 %v91
    %122 = vmatpush.xpose.msra.mxu0 %v88
    %123 = vmatpush.xpose.msra.mxu0 %v85
    %124 = vmatpush.xpose.msra.mxu0 %v82
    %125 = vmatpush.xpose.msra.mxu0 %v79
    %126 = vmatpush.xpose.msra.mxu0 %v76
    %127 = vmatpush.xpose.msra.mxu0 %v73
    %128 = vmatpush.xpose.msra.mxu0 %v70
    %129 = vmatpush.xpose.msra.mxu0 %v67
    %130 = vmatmul.f32.gmra.mxu0 %v61
    %v131 = vpop.f32.mrf.mxu0
    %v132 = vadd.f32 %v52, %v131
    %133 = vmatmul.f32.gmra.mxu0 %v64
    %v134 = vpop.f32.mrf.mxu0
    %v135 = vadd.f32 %v57, %v134
    %136 = vdwg.mxu0
    %v137 = vmax.f32 %v132, 0.0
    %v138 = vmax.f32 %v135, 0.0
    %v139 = vld [vmem:[%s3] sm:$0xff]
    %v140 = vld [vmem:[%s4] sm:$0xff]
    %142 = vset.pattern.permute.xlu0 0
    %143 = vperm.xlu0 %142, %v140
    %v144 = vpop.permute.xlu0 %143
    %vm146 = vcmask 130048
    %v148 = vsel %vm146, %v139, 0
    %150 = vmatpush.msra.mxu0 0.0
    %151 = vmatpush.msra.mxu0 0.0
    %152 = vmatpush.msra.mxu0 0.0
    %153 = vmatpush.msra.mxu0 0.0
    %154 = vmatpush.msra.mxu0 0.0
    %155 = vmatpush.msra.mxu0 0.0
    %156 = vmatpush.msra.mxu0 0.0
    %157 = vmatpush.msra.mxu0 0.0
    %158 = vmatpush.msra.mxu0 0.0
    %159 = vmatpush.msra.mxu0 0.0
    %160 = vmatpush.msra.mxu0 0.0
    %161 = vmatpush.msra.mxu0 0.0
    %162 = vmatpush.msra.mxu0 0.0
    %163 = vmatpush.msra.mxu0 0.0
    %164 = vmatpush.msra.mxu0 %v138
    %165 = vmatpush.msra.mxu0 %v137
    %166 = vmatmul.f32.gmra.mxu0 %v148
    %v167 = vpop.f32.mrf.mxu0
    %v168 = vadd.f32 %v144, %v167
    %169 = vdwg.mxu0
    %v170 = vmax.f32 %v168, 0.0
    %v171 = vld [vmem:[%s5] sm:$0xff]
    %173 = vset.pattern.permute.xlu0 0
    %174 = vperm.xlu0 %173, %v171
    %v175 = vpop.permute.xlu0 %174
    %v177 = vmul.f32 %v175, %v170
    %v178 = vrot.slane %v177, 4
    %v179 = vadd.f32 %v177, %v178
    %v180 = vrot.slane %v179, 2
    %v181 = vadd.f32 %v179, %v180
    %v182 = vrot.slane %v181, 1
    %v183 = vadd.f32 %v181, %v182
    %v184 = vld [vmem:[#allocation2] sm:$0x1]
    %186 = vset.pattern.permute.xlu0 0
    %187 = vperm.xlu0 %186, %v184
    %v188 = vpop.permute.xlu0 %187
    %v190 = vperm.slane %v188, 0
    %v191 = vadd.f32 %v183, %v190
    %v192 = vxor.u32 %v191, 2147483648
    %v193 = vmul.f32 %v192, 1.442695
    %v194 = vpow.pop %v193
    %v195 = vadd.f32 %v194, 1.0
    %v196 = vrcp.pop %v195
    %v197 = vmul.f32 %v195, %v196
    %v198 = vsub.f32 1.0, %v197
    %v199 = vmul.f32 %v196, %v198
    %v200 = vadd.f32 %v196, %v199
    %vm201 = vweird.f32 %v195
    %vm202 = vweird.f32 %v196
    %vm203 = vmor %vm201, %vm202
    %v204 = vsel %vm203, %v196, %v200
    %v205 = vand.u32 2147483647, %v195
    %vm206 = vcmp.eq.f32.partialorder %v205, 8.507059e+37
    %v207 = vand.u32 %v195, 2147483648
    %v208 = vor.u32 1.1754944e-38, %v207
    %v209 = vsel %vm206, %v208, %v204
    %v210 = vmul.f32 1.0, %v209
    %211 = vst [vmem:[#allocation3] sm:$0x1] %v210
    // Predicated region
    $region30: #{tpu_custom_call.1} parent=1 // pred_check
      _
    $region31: #{tpu_custom_call.1} parent=1 // pred_check_branch
      %213 = sbr.rel (0) target = $region33
    $region32: #{tpu_custom_call.1} parent=1 // pred_region
      %215 = vsyncadd [#allocation4], 0
      %s217 = sshll.u32 [#allocation3], 4
      %s218 = int_to_ptr.vmem [resolvable:$true] %s217
      %s219 = sshll.u32 %s7, 4
      %s220 = int_to_ptr.hbm [resolvable:$true] %s219
      %222 = dma.vmem_to_hbm [thread:$0]  %s218, 16, %s220, [#allocation4]
    $region33: #{tpu_custom_call.1} parent=1 // pred_fallthru
      _
    // Predicated region
    $region34: #{tpu_custom_call.1} parent=1 // pred_check
      _
    $region35: #{tpu_custom_call.1} parent=1 // pred_check_branch
      %224 = sbr.rel (0) target = $region37
    $region36: #{tpu_custom_call.1} parent=1 // pred_region
      %226 = dma.done [#allocation4], 16
    $region37: #{tpu_custom_call.1} parent=1 // pred_fallthru
      _
    %227 = vsyncpa [#allocation4], 1

</llo_original>
